<compile_context>
chip_gen: v7x
topology: tpu7x:2x2x1
jax: 0.10.0
libtpu: 0.0.40
codegen_flags: <defaults>
</compile_context>

<pallas_src>
import math
import functools

import jax
import jax.numpy as jnp
from jax.experimental import pallas as pl
from jax.experimental.pallas import tpu as pltpu


# ----------------------------------------------------------------------------
# Kernel
# ----------------------------------------------------------------------------
def _lstm_fused_kernel(xp_ref, w_rec_ref, out_ref, *, hidden_size, num_dirs, unroll):
    """Fused (bi)directional LSTM recurrence over one batch tile.

    xp_ref   : (T, Bt, D*4H) f32, time-major, hoisted input projection
               x @ W_ih^T + (b_ih + b_hh), gate columns packed as
               [i_f,i_b, f_f,f_b, o_f,o_b, g_f,g_b] (backward dir already time-reversed).
    w_rec_ref: (D*H, D*4H) recurrent weights (bf16), block-diagonal per gate:
               rows 0:H = forward h, rows H:2H = backward h.
    out_ref  : (T, Bt, D*H) f32, time-major. Row t holds [h_f(t) | h_b(T-1-t)];
               the wrapper flips the backward half along time.
    """
    T, Bt, _ = xp_ref.shape
    DH = num_dirs * hidden_size
    n_sig = 3 * DH

    w_rec = w_rec_ref[...]  # loaded once, resident across the whole time loop

    def body(t, carry):
        h_cat, c_cat = carry                                         # (Bt, DH) f32 each
        # One wide recurrent matmul feeding both directions (block-diagonal weights),
        # bf16 operands -> f32 accumulation on the MXU.
        rec = jnp.dot(h_cat.astype(w_rec.dtype), w_rec,
                      preferred_element_type=jnp.float32)            # (Bt, 4*DH)
        gates = xp_ref[t] + rec
        sig = jax.nn.sigmoid(gates[:, :n_sig])                       # one EUP pass: i, f, o (both dirs)
        g_g = jnp.tanh(gates[:, n_sig:])                             # one EUP pass: g (both dirs)
        i_g = sig[:, 0 * DH:1 * DH]
        f_g = sig[:, 1 * DH:2 * DH]
        o_g = sig[:, 2 * DH:3 * DH]
        c_new = f_g * c_cat + i_g * g_g                              # packed fwd/bwd state update
        h_new = o_g * jnp.tanh(c_new)                                # one EUP pass over DH lanes
        out_ref[t] = h_new.astype(out_ref.dtype)                     # single lane-dense store per step
        return h_new, c_new

    z = jnp.zeros((Bt, DH), jnp.float32)
    jax.lax.fori_loop(0, T, body, (z, z), unroll=unroll)


# ----------------------------------------------------------------------------
# Wrapper
# ----------------------------------------------------------------------------
_GATE_PERM = (0, 1, 3, 2)  # PyTorch row-chunk order [i, f, g, o] -> packed order [i, f, o, g]


def _round_up(x, m):
    return (x + m - 1) // m * m


def _pack_gate_rows(w, H):
    """Reorder the leading 4H axis of a PyTorch LSTM weight/bias from [i,f,g,o] to [i,f,o,g]."""
    return jnp.concatenate([w[g * H:(g + 1) * H] for g in _GATE_PERM], axis=0)


def _choose_btile(B, T, H, D, target=256, budget_bytes=32 * 2**20):
    """Batch tile: fill MXU rows when possible, but respect a double-buffered VMEM budget."""
    bt = min(_round_up(B, 8), target)
    while bt > 8 and 2 * T * bt * (D * 4 * H + D * H) * 4 > budget_bytes:
        bt = max(8, _round_up(bt // 2, 8))
    return bt


def single_rnn_forward(x_btf, params, hidden_size, bidirectional, *,
                       btile=None, rec_dtype=jnp.bfloat16):
    """SingleRNN.forward equivalent (single-layer LSTM, batch_first).

    x_btf: (batch, seq, input_size); returns (batch, seq, hidden_size * (2 if bidirectional else 1)).
    """
    H = hidden_size
    B, T, _ = x_btf.shape
    D = 2 if bidirectional else 1
    DG = D * 4 * H
    DH = D * H

    # ---- per-direction weight packing (gate column order [i, f, o, g]) ----
    w_in_f = _pack_gate_rows(params["w_ih_f"], H).T                          # (I, 4H)
    w_hh_f = _pack_gate_rows(params["w_hh_f"], H).T                          # (H, 4H)
    b_f = _pack_gate_rows(params["b_ih_f"] + params["b_hh_f"], H)            # (4H,)

    # Hoisted (non-recurrent) input projection, batch-first -> time-major folded in.
    xp_f = jnp.einsum("bti,ig->tbg", x_btf, w_in_f) + b_f                    # (T, B, 4H)

    if bidirectional:
        w_in_b = _pack_gate_rows(params["w_ih_b"], H).T
        w_hh_b = _pack_gate_rows(params["w_hh_b"], H).T
        b_b = _pack_gate_rows(params["b_ih_b"] + params["b_hh_b"], H)
        # Backward direction consumes the time-reversed sequence: fold the reversal into the
        # hoisted projection so the kernel reads xp_ref[t] exactly once per step.
        xp_b = jnp.einsum("bti,ig->tbg", x_btf[:, ::-1, :], w_in_b) + b_b    # (T, B, 4H)

        # Interleave fwd/bwd at H granularity -> columns [i_f,i_b,f_f,f_b,o_f,o_b,g_f,g_b].
        xp = jnp.stack([xp_f.reshape(T, B, 4, H), xp_b.reshape(T, B, 4, H)], axis=3)
        xp = xp.reshape(T, B, DG)

        # Block-diagonal (per gate) recurrent weights: rows 0:H = h_f, rows H:2H = h_b.
        w_rec = jnp.zeros((DH, DG), jnp.float32)
        for g in range(4):
            w_rec = w_rec.at[:H, (2 * g) * H:(2 * g + 1) * H].set(w_hh_f[:, g * H:(g + 1) * H])
            w_rec = w_rec.at[H:, (2 * g + 1) * H:(2 * g + 2) * H].set(w_hh_b[:, g * H:(g + 1) * H])
    else:
        xp = xp_f
        w_rec = w_hh_f

    w_rec = w_rec.astype(rec_dtype)

    # ---- batch-tiled grid ----
    if btile is None:
        btile = _choose_btile(B, T, H, D)
    B_pad = _round_up(max(B, btile), btile)
    if B_pad != B:
        xp = jnp.pad(xp, ((0, 0), (0, B_pad - B), (0, 0)))

    tile_bytes = T * btile * (DG + DH) * 4
    vmem_limit = int(min(64 * 2**20,
                         max(32 * 2**20,
                             3 * tile_bytes + w_rec.size * w_rec.dtype.itemsize + 2**20)))

    kernel = functools.partial(
        _lstm_fused_kernel, hidden_size=H, num_dirs=D, unroll=max(1, min(8, T)))

    out_raw = pl.pallas_call(
        kernel,
        out_shape=jax.ShapeDtypeStruct((T, B_pad, DH), jnp.float32),
        grid=(B_pad // btile,),
        in_specs=[
            pl.BlockSpec((T, btile, DG), lambda b: (0, b, 0)),
            pl.BlockSpec((DH, DG), lambda b: (0, 0)),
        ],
        out_specs=pl.BlockSpec((T, btile, DH), lambda b: (0, b, 0)),
        compiler_params=pltpu.CompilerParams(
            dimension_semantics=("parallel",),
            vmem_limit_bytes=vmem_limit,
        ),
    )(xp, w_rec)

    out_raw = out_raw[:, :B]
    if bidirectional:
        # Backward half was produced in loop order (row t holds time T-1-t): flip along time.
        out_tm = jnp.concatenate([out_raw[:, :, :H], out_raw[::-1, :, H:]], axis=-1)
    else:
        out_tm = out_raw
    return jnp.transpose(out_tm, (1, 0, 2))  # back to batch-first (B, T, D*H)


# ---------------- pure-JAX reference (for correctness check) -----------------
def _lstm_ref_direction(x_tm, w_ih, w_hh, b_ih, b_hh, hidden_size):
    T, B, _ = x_tm.shape
    H = hidden_size

    def step(carry, x_t):
        h, c = carry
        gates = x_t @ w_ih.T + h @ w_hh.T + b_ih + b_hh
        i_g = jax.nn.sigmoid(gates[:, 0 * H:1 * H])
        f_g = jax.nn.sigmoid(gates[:, 1 * H:2 * H])
        g_g = jnp.tanh(gates[:, 2 * H:3 * H])
        o_g = jax.nn.sigmoid(gates[:, 3 * H:4 * H])
        c_new = f_g * c + i_g * g_g
        h_new = o_g * jnp.tanh(c_new)
        return (h_new, c_new), h_new

    h0 = jnp.zeros((B, H), jnp.float32)
    c0 = jnp.zeros((B, H), jnp.float32)
    _, hs = jax.lax.scan(step, (h0, c0), x_tm)
    return hs


def single_rnn_ref(x_btf, params, hidden_size, bidirectional):
    H = hidden_size
    x_tm = jnp.transpose(x_btf, (1, 0, 2))
    out_fwd = _lstm_ref_direction(
        x_tm, params["w_ih_f"], params["w_hh_f"], params["b_ih_f"], params["b_hh_f"], H)
    outs = [out_fwd]
    if bidirectional:
        out_bwd = _lstm_ref_direction(
            x_tm[::-1], params["w_ih_b"], params["w_hh_b"], params["b_ih_b"], params["b_hh_b"], H
        )[::-1]
        outs.append(out_bwd)
    return jnp.transpose(jnp.concatenate(outs, axis=-1), (1, 0, 2))


def init_params(key, input_size, hidden_size, bidirectional):
    """Deterministic init matching nn.LSTM: U(-1/sqrt(H), 1/sqrt(H))."""
    bound = 1.0 / math.sqrt(hidden_size)
    names = ["w_ih_f", "w_hh_f", "b_ih_f", "b_hh_f"]
    shapes = [
        (4 * hidden_size, input_size),
        (4 * hidden_size, hidden_size),
        (4 * hidden_size,),
        (4 * hidden_size,),
    ]
    if bidirectional:
        names += ["w_ih_b", "w_hh_b", "b_ih_b", "b_hh_b"]
        shapes += shapes[:4]
    keys = jax.random.split(key, len(names))
    return {
        n: jax.random.uniform(k, s, jnp.float32, -bound, bound)
        for n, s, k in zip(names, shapes, keys)
    }


if __name__ == "__main__":
    # SingleRNN('LSTM', input_size=16, hidden_size=32, n_layers=1, dropout=0, bidirectional)
    batch, seq, input_size, hidden_size = 2, 8, 16, 32

    key = jax.random.PRNGKey(0)
    k_x, k_p = jax.random.split(key)
    x = jax.random.normal(k_x, (batch, seq, input_size), jnp.float32)

    fwd = jax.jit(single_rnn_forward, static_argnums=(2, 3),
                  static_argnames=("btile", "rec_dtype"))

    for bidirectional in (True, False):
        params = init_params(k_p, input_size, hidden_size, bidirectional)
        ref = jax.block_until_ready(single_rnn_ref(x, params, hidden_size, bidirectional))
        n_dirs = 2 if bidirectional else 1

        # Exact-math check (f32 recurrent matmul): validates gate packing / time reversal.
        out_f32 = jax.block_until_ready(
            fwd(x, params, hidden_size, bidirectional, rec_dtype=jnp.float32))
        assert out_f32.shape == (batch, seq, hidden_size * n_dirs)
        assert jnp.allclose(out_f32, ref, atol=1e-4, rtol=1e-4), (
            f"Pallas LSTM (f32) mismatch vs reference (bidirectional={bidirectional})")

        # Default fast path (bf16 recurrent matmul, f32 accumulation/state).
        out = jax.block_until_ready(fwd(x, params, hidden_size, bidirectional))
        assert out.shape == (batch, seq, hidden_size * n_dirs)
        assert jnp.allclose(out, ref, atol=3e-2, rtol=3e-2), (
            f"Pallas LSTM (bf16) mismatch vs reference (bidirectional={bidirectional})")

    print("KERNEL_OK")
</pallas_src>

<mosaic_0001>
module attributes {stable_mosaic.version = 11 : i64} {
  func.func @_lstm_fused_kernel(%arg0: i32, %arg1: memref<8x8x256xf32, #tpu.memory_space<vmem>>, %arg2: memref<64x256xf32, #tpu.memory_space<vmem>>, %arg3: memref<8x8x64xf32, #tpu.memory_space<vmem>>) attributes {dimension_semantics = [#tpu.dimension_semantics<parallel>], iteration_bounds = array<i64: 1>, scalar_prefetch = 0 : i64, scratch_operands = 0 : i64, tpu.core_type = #tpu.core_type<tc>, window_params = [{transform_indices = @transform_0, window_bounds = array<i64: 8, 8, 256>}, {pipeline_mode = #tpu.pipeline_mode<synchronous>, transform_indices = @transform_1, window_bounds = array<i64: 64, 256>}, {transform_indices = @transform_2, window_bounds = array<i64: 8, 8, 64>}]} {
    %c0 = arith.constant 0 : index
    %c0_0 = arith.constant 0 : index
    %0 = vector.load %arg2[%c0, %c0_0] : memref<64x256xf32, #tpu.memory_space<vmem>>, vector<64x256xf32>
    %cst = arith.constant 0.000000e+00 : f32
    %1 = vector.broadcast %cst : f32 to vector<8x64xf32>
    %c0_i32 = arith.constant 0 : i32
    %cst_1 = arith.constant dense<0.000000e+00> : vector<8x256xf32>
    %2 = tpu.matmul %1, %0, %cst_1 {dimension_numbers = #tpu.dot_dimension_numbers<[1], [0], [0], [1], [0, 0, 1, 1], [], []>} : vector<8x64xf32>, vector<64x256xf32>, vector<8x256xf32> -> vector<8x256xf32>
    %3 = arith.index_cast %c0_i32 : i32 to index
    %c0_2 = arith.constant 0 : index
    %c0_3 = arith.constant 0 : index
    %4 = vector.load %arg1[%3, %c0_2, %c0_3] : memref<8x8x256xf32, #tpu.memory_space<vmem>>, vector<1x8x256xf32>
    %5 = vector.shape_cast %4 : vector<1x8x256xf32> to vector<8x256xf32>
    %6 = arith.addf %5, %2 : vector<8x256xf32>
    %7 = vector.extract_strided_slice %6 {offsets = [0, 0], sizes = [8, 192], strides = [1, 1]} : vector<8x256xf32> to vector<8x192xf32>
    %8 = arith.negf %7 : vector<8x192xf32>
    %9 = math.exp %8 : vector<8x192xf32>
    %cst_4 = arith.constant 1.000000e+00 : f32
    %10 = vector.broadcast %cst_4 : f32 to vector<8x192xf32>
    %11 = arith.addf %10, %9 : vector<8x192xf32>
    %12 = arith.divf %10, %11 : vector<8x192xf32>
    %13 = vector.extract_strided_slice %6 {offsets = [0, 192], sizes = [8, 64], strides = [1, 1]} : vector<8x256xf32> to vector<8x64xf32>
    %14 = math.tanh %13 : vector<8x64xf32>
    %15 = vector.extract_strided_slice %12 {offsets = [0, 0], sizes = [8, 64], strides = [1, 1]} : vector<8x192xf32> to vector<8x64xf32>
    %16 = vector.extract_strided_slice %12 {offsets = [0, 64], sizes = [8, 64], strides = [1, 1]} : vector<8x192xf32> to vector<8x64xf32>
    %17 = vector.extract_strided_slice %12 {offsets = [0, 128], sizes = [8, 64], strides = [1, 1]} : vector<8x192xf32> to vector<8x64xf32>
    %18 = arith.mulf %16, %1 : vector<8x64xf32>
    %19 = arith.mulf %15, %14 : vector<8x64xf32>
    %20 = arith.addf %18, %19 : vector<8x64xf32>
    %21 = math.tanh %20 : vector<8x64xf32>
    %22 = arith.mulf %17, %21 : vector<8x64xf32>
    %23 = arith.index_cast %c0_i32 : i32 to index
    %c0_5 = arith.constant 0 : index
    %c0_6 = arith.constant 0 : index
    %24 = vector.load %arg3[%23, %c0_5, %c0_6] : memref<8x8x64xf32, #tpu.memory_space<vmem>>, vector<1x8x64xf32>
    %25 = vector.shape_cast %24 : vector<1x8x64xf32> to vector<8x64xf32>
    %26 = vector.shape_cast %22 : vector<8x64xf32> to vector<1x8x64xf32>
    tpu.vector_store %arg3[%23, %c0_5, %c0_6], %26 {strides = array<i32>} : memref<8x8x64xf32, #tpu.memory_space<vmem>>, vector<1x8x64xf32>,
    %c1_i32 = arith.constant 1 : i32
    %cst_7 = arith.constant dense<0.000000e+00> : vector<8x256xf32>
    %27 = tpu.matmul %22, %0, %cst_7 {dimension_numbers = #tpu.dot_dimension_numbers<[1], [0], [0], [1], [0, 0, 1, 1], [], []>} : vector<8x64xf32>, vector<64x256xf32>, vector<8x256xf32> -> vector<8x256xf32>
    %28 = arith.index_cast %c1_i32 : i32 to index
    %c0_8 = arith.constant 0 : index
    %c0_9 = arith.constant 0 : index
    %29 = vector.load %arg1[%28, %c0_8, %c0_9] : memref<8x8x256xf32, #tpu.memory_space<vmem>>, vector<1x8x256xf32>
    %30 = vector.shape_cast %29 : vector<1x8x256xf32> to vector<8x256xf32>
    %31 = arith.addf %30, %27 : vector<8x256xf32>
    %32 = vector.extract_strided_slice %31 {offsets = [0, 0], sizes = [8, 192], strides = [1, 1]} : vector<8x256xf32> to vector<8x192xf32>
    %33 = arith.negf %32 : vector<8x192xf32>
    %34 = math.exp %33 : vector<8x192xf32>
    %cst_10 = arith.constant 1.000000e+00 : f32
    %35 = vector.broadcast %cst_10 : f32 to vector<8x192xf32>
    %36 = arith.addf %35, %34 : vector<8x192xf32>
    %37 = arith.divf %35, %36 : vector<8x192xf32>
    %38 = vector.extract_strided_slice %31 {offsets = [0, 192], sizes = [8, 64], strides = [1, 1]} : vector<8x256xf32> to vector<8x64xf32>
    %39 = math.tanh %38 : vector<8x64xf32>
    %40 = vector.extract_strided_slice %37 {offsets = [0, 0], sizes = [8, 64], strides = [1, 1]} : vector<8x192xf32> to vector<8x64xf32>
    %41 = vector.extract_strided_slice %37 {offsets = [0, 64], sizes = [8, 64], strides = [1, 1]} : vector<8x192xf32> to vector<8x64xf32>
    %42 = vector.extract_strided_slice %37 {offsets = [0, 128], sizes = [8, 64], strides = [1, 1]} : vector<8x192xf32> to vector<8x64xf32>
    %43 = arith.mulf %41, %20 : vector<8x64xf32>
    %44 = arith.mulf %40, %39 : vector<8x64xf32>
    %45 = arith.addf %43, %44 : vector<8x64xf32>
    %46 = math.tanh %45 : vector<8x64xf32>
    %47 = arith.mulf %42, %46 : vector<8x64xf32>
    %48 = arith.index_cast %c1_i32 : i32 to index
    %c0_11 = arith.constant 0 : index
    %c0_12 = arith.constant 0 : index
    %49 = vector.load %arg3[%48, %c0_11, %c0_12] : memref<8x8x64xf32, #tpu.memory_space<vmem>>, vector<1x8x64xf32>
    %50 = vector.shape_cast %49 : vector<1x8x64xf32> to vector<8x64xf32>
    %51 = vector.shape_cast %47 : vector<8x64xf32> to vector<1x8x64xf32>
    tpu.vector_store %arg3[%48, %c0_11, %c0_12], %51 {strides = array<i32>} : memref<8x8x64xf32, #tpu.memory_space<vmem>>, vector<1x8x64xf32>,
    %c2_i32 = arith.constant 2 : i32
    %cst_13 = arith.constant dense<0.000000e+00> : vector<8x256xf32>
    %52 = tpu.matmul %47, %0, %cst_13 {dimension_numbers = #tpu.dot_dimension_numbers<[1], [0], [0], [1], [0, 0, 1, 1], [], []>} : vector<8x64xf32>, vector<64x256xf32>, vector<8x256xf32> -> vector<8x256xf32>
    %53 = arith.index_cast %c2_i32 : i32 to index
    %c0_14 = arith.constant 0 : index
    %c0_15 = arith.constant 0 : index
    %54 = vector.load %arg1[%53, %c0_14, %c0_15] : memref<8x8x256xf32, #tpu.memory_space<vmem>>, vector<1x8x256xf32>
    %55 = vector.shape_cast %54 : vector<1x8x256xf32> to vector<8x256xf32>
    %56 = arith.addf %55, %52 : vector<8x256xf32>
    %57 = vector.extract_strided_slice %56 {offsets = [0, 0], sizes = [8, 192], strides = [1, 1]} : vector<8x256xf32> to vector<8x192xf32>
    %58 = arith.negf %57 : vector<8x192xf32>
    %59 = math.exp %58 : vector<8x192xf32>
    %cst_16 = arith.constant 1.000000e+00 : f32
    %60 = vector.broadcast %cst_16 : f32 to vector<8x192xf32>
    %61 = arith.addf %60, %59 : vector<8x192xf32>
    %62 = arith.divf %60, %61 : vector<8x192xf32>
    %63 = vector.extract_strided_slice %56 {offsets = [0, 192], sizes = [8, 64], strides = [1, 1]} : vector<8x256xf32> to vector<8x64xf32>
    %64 = math.tanh %63 : vector<8x64xf32>
    %65 = vector.extract_strided_slice %62 {offsets = [0, 0], sizes = [8, 64], strides = [1, 1]} : vector<8x192xf32> to vector<8x64xf32>
    %66 = vector.extract_strided_slice %62 {offsets = [0, 64], sizes = [8, 64], strides = [1, 1]} : vector<8x192xf32> to vector<8x64xf32>
    %67 = vector.extract_strided_slice %62 {offsets = [0, 128], sizes = [8, 64], strides = [1, 1]} : vector<8x192xf32> to vector<8x64xf32>
    %68 = arith.mulf %66, %45 : vector<8x64xf32>
    %69 = arith.mulf %65, %64 : vector<8x64xf32>
    %70 = arith.addf %68, %69 : vector<8x64xf32>
    %71 = math.tanh %70 : vector<8x64xf32>
    %72 = arith.mulf %67, %71 : vector<8x64xf32>
    %73 = arith.index_cast %c2_i32 : i32 to index
    %c0_17 = arith.constant 0 : index
    %c0_18 = arith.constant 0 : index
    %74 = vector.load %arg3[%73, %c0_17, %c0_18] : memref<8x8x64xf32, #tpu.memory_space<vmem>>, vector<1x8x64xf32>
    %75 = vector.shape_cast %74 : vector<1x8x64xf32> to vector<8x64xf32>
    %76 = vector.shape_cast %72 : vector<8x64xf32> to vector<1x8x64xf32>
    tpu.vector_store %arg3[%73, %c0_17, %c0_18], %76 {strides = array<i32>} : memref<8x8x64xf32, #tpu.memory_space<vmem>>, vector<1x8x64xf32>,
    %c3_i32 = arith.constant 3 : i32
    %cst_19 = arith.constant dense<0.000000e+00> : vector<8x256xf32>
    %77 = tpu.matmul %72, %0, %cst_19 {dimension_numbers = #tpu.dot_dimension_numbers<[1], [0], [0], [1], [0, 0, 1, 1], [], []>} : vector<8x64xf32>, vector<64x256xf32>, vector<8x256xf32> -> vector<8x256xf32>
    %78 = arith.index_cast %c3_i32 : i32 to index
    %c0_20 = arith.constant 0 : index
    %c0_21 = arith.constant 0 : index
    %79 = vector.load %arg1[%78, %c0_20, %c0_21] : memref<8x8x256xf32, #tpu.memory_space<vmem>>, vector<1x8x256xf32>
    %80 = vector.shape_cast %79 : vector<1x8x256xf32> to vector<8x256xf32>
    %81 = arith.addf %80, %77 : vector<8x256xf32>
    %82 = vector.extract_strided_slice %81 {offsets = [0, 0], sizes = [8, 192], strides = [1, 1]} : vector<8x256xf32> to vector<8x192xf32>
    %83 = arith.negf %82 : vector<8x192xf32>
    %84 = math.exp %83 : vector<8x192xf32>
    %cst_22 = arith.constant 1.000000e+00 : f32
    %85 = vector.broadcast %cst_22 : f32 to vector<8x192xf32>
    %86 = arith.addf %85, %84 : vector<8x192xf32>
    %87 = arith.divf %85, %86 : vector<8x192xf32>
    %88 = vector.extract_strided_slice %81 {offsets = [0, 192], sizes = [8, 64], strides = [1, 1]} : vector<8x256xf32> to vector<8x64xf32>
    %89 = math.tanh %88 : vector<8x64xf32>
    %90 = vector.extract_strided_slice %87 {offsets = [0, 0], sizes = [8, 64], strides = [1, 1]} : vector<8x192xf32> to vector<8x64xf32>
    %91 = vector.extract_strided_slice %87 {offsets = [0, 64], sizes = [8, 64], strides = [1, 1]} : vector<8x192xf32> to vector<8x64xf32>
    %92 = vector.extract_strided_slice %87 {offsets = [0, 128], sizes = [8, 64], strides = [1, 1]} : vector<8x192xf32> to vector<8x64xf32>
    %93 = arith.mulf %91, %70 : vector<8x64xf32>
    %94 = arith.mulf %90, %89 : vector<8x64xf32>
    %95 = arith.addf %93, %94 : vector<8x64xf32>
    %96 = math.tanh %95 : vector<8x64xf32>
    %97 = arith.mulf %92, %96 : vector<8x64xf32>
    %98 = arith.index_cast %c3_i32 : i32 to index
    %c0_23 = arith.constant 0 : index
    %c0_24 = arith.constant 0 : index
    %99 = vector.load %arg3[%98, %c0_23, %c0_24] : memref<8x8x64xf32, #tpu.memory_space<vmem>>, vector<1x8x64xf32>
    %100 = vector.shape_cast %99 : vector<1x8x64xf32> to vector<8x64xf32>
    %101 = vector.shape_cast %97 : vector<8x64xf32> to vector<1x8x64xf32>
    tpu.vector_store %arg3[%98, %c0_23, %c0_24], %101 {strides = array<i32>} : memref<8x8x64xf32, #tpu.memory_space<vmem>>, vector<1x8x64xf32>,
    %c4_i32 = arith.constant 4 : i32
    %cst_25 = arith.constant dense<0.000000e+00> : vector<8x256xf32>
    %102 = tpu.matmul %97, %0, %cst_25 {dimension_numbers = #tpu.dot_dimension_numbers<[1], [0], [0], [1], [0, 0, 1, 1], [], []>} : vector<8x64xf32>, vector<64x256xf32>, vector<8x256xf32> -> vector<8x256xf32>
    %103 = arith.index_cast %c4_i32 : i32 to index
    %c0_26 = arith.constant 0 : index
    %c0_27 = arith.constant 0 : index
    %104 = vector.load %arg1[%103, %c0_26, %c0_27] : memref<8x8x256xf32, #tpu.memory_space<vmem>>, vector<1x8x256xf32>
    %105 = vector.shape_cast %104 : vector<1x8x256xf32> to vector<8x256xf32>
    %106 = arith.addf %105, %102 : vector<8x256xf32>
    %107 = vector.extract_strided_slice %106 {offsets = [0, 0], sizes = [8, 192], strides = [1, 1]} : vector<8x256xf32> to vector<8x192xf32>
    %108 = arith.negf %107 : vector<8x192xf32>
    %109 = math.exp %108 : vector<8x192xf32>
    %cst_28 = arith.constant 1.000000e+00 : f32
    %110 = vector.broadcast %cst_28 : f32 to vector<8x192xf32>
    %111 = arith.addf %110, %109 : vector<8x192xf32>
    %112 = arith.divf %110, %111 : vector<8x192xf32>
    %113 = vector.extract_strided_slice %106 {offsets = [0, 192], sizes = [8, 64], strides = [1, 1]} : vector<8x256xf32> to vector<8x64xf32>
    %114 = math.tanh %113 : vector<8x64xf32>
    %115 = vector.extract_strided_slice %112 {offsets = [0, 0], sizes = [8, 64], strides = [1, 1]} : vector<8x192xf32> to vector<8x64xf32>
    %116 = vector.extract_strided_slice %112 {offsets = [0, 64], sizes = [8, 64], strides = [1, 1]} : vector<8x192xf32> to vector<8x64xf32>
    %117 = vector.extract_strided_slice %112 {offsets = [0, 128], sizes = [8, 64], strides = [1, 1]} : vector<8x192xf32> to vector<8x64xf32>
    %118 = arith.mulf %116, %95 : vector<8x64xf32>
    %119 = arith.mulf %115, %114 : vector<8x64xf32>
    %120 = arith.addf %118, %119 : vector<8x64xf32>
    %121 = math.tanh %120 : vector<8x64xf32>
    %122 = arith.mulf %117, %121 : vector<8x64xf32>
    %123 = arith.index_cast %c4_i32 : i32 to index
    %c0_29 = arith.constant 0 : index
    %c0_30 = arith.constant 0 : index
    %124 = vector.load %arg3[%123, %c0_29, %c0_30] : memref<8x8x64xf32, #tpu.memory_space<vmem>>, vector<1x8x64xf32>
    %125 = vector.shape_cast %124 : vector<1x8x64xf32> to vector<8x64xf32>
    %126 = vector.shape_cast %122 : vector<8x64xf32> to vector<1x8x64xf32>
    tpu.vector_store %arg3[%123, %c0_29, %c0_30], %126 {strides = array<i32>} : memref<8x8x64xf32, #tpu.memory_space<vmem>>, vector<1x8x64xf32>,
    %c5_i32 = arith.constant 5 : i32
    %cst_31 = arith.constant dense<0.000000e+00> : vector<8x256xf32>
    %127 = tpu.matmul %122, %0, %cst_31 {dimension_numbers = #tpu.dot_dimension_numbers<[1], [0], [0], [1], [0, 0, 1, 1], [], []>} : vector<8x64xf32>, vector<64x256xf32>, vector<8x256xf32> -> vector<8x256xf32>
    %128 = arith.index_cast %c5_i32 : i32 to index
    %c0_32 = arith.constant 0 : index
    %c0_33 = arith.constant 0 : index
    %129 = vector.load %arg1[%128, %c0_32, %c0_33] : memref<8x8x256xf32, #tpu.memory_space<vmem>>, vector<1x8x256xf32>
    %130 = vector.shape_cast %129 : vector<1x8x256xf32> to vector<8x256xf32>
    %131 = arith.addf %130, %127 : vector<8x256xf32>
    %132 = vector.extract_strided_slice %131 {offsets = [0, 0], sizes = [8, 192], strides = [1, 1]} : vector<8x256xf32> to vector<8x192xf32>
    %133 = arith.negf %132 : vector<8x192xf32>
    %134 = math.exp %133 : vector<8x192xf32>
    %cst_34 = arith.constant 1.000000e+00 : f32
    %135 = vector.broadcast %cst_34 : f32 to vector<8x192xf32>
    %136 = arith.addf %135, %134 : vector<8x192xf32>
    %137 = arith.divf %135, %136 : vector<8x192xf32>
    %138 = vector.extract_strided_slice %131 {offsets = [0, 192], sizes = [8, 64], strides = [1, 1]} : vector<8x256xf32> to vector<8x64xf32>
    %139 = math.tanh %138 : vector<8x64xf32>
    %140 = vector.extract_strided_slice %137 {offsets = [0, 0], sizes = [8, 64], strides = [1, 1]} : vector<8x192xf32> to vector<8x64xf32>
    %141 = vector.extract_strided_slice %137 {offsets = [0, 64], sizes = [8, 64], strides = [1, 1]} : vector<8x192xf32> to vector<8x64xf32>
    %142 = vector.extract_strided_slice %137 {offsets = [0, 128], sizes = [8, 64], strides = [1, 1]} : vector<8x192xf32> to vector<8x64xf32>
    %143 = arith.mulf %141, %120 : vector<8x64xf32>
    %144 = arith.mulf %140, %139 : vector<8x64xf32>
    %145 = arith.addf %143, %144 : vector<8x64xf32>
    %146 = math.tanh %145 : vector<8x64xf32>
    %147 = arith.mulf %142, %146 : vector<8x64xf32>
    %148 = arith.index_cast %c5_i32 : i32 to index
    %c0_35 = arith.constant 0 : index
    %c0_36 = arith.constant 0 : index
    %149 = vector.load %arg3[%148, %c0_35, %c0_36] : memref<8x8x64xf32, #tpu.memory_space<vmem>>, vector<1x8x64xf32>
    %150 = vector.shape_cast %149 : vector<1x8x64xf32> to vector<8x64xf32>
    %151 = vector.shape_cast %147 : vector<8x64xf32> to vector<1x8x64xf32>
    tpu.vector_store %arg3[%148, %c0_35, %c0_36], %151 {strides = array<i32>} : memref<8x8x64xf32, #tpu.memory_space<vmem>>, vector<1x8x64xf32>,
    %c6_i32 = arith.constant 6 : i32
    %cst_37 = arith.constant dense<0.000000e+00> : vector<8x256xf32>
    %152 = tpu.matmul %147, %0, %cst_37 {dimension_numbers = #tpu.dot_dimension_numbers<[1], [0], [0], [1], [0, 0, 1, 1], [], []>} : vector<8x64xf32>, vector<64x256xf32>, vector<8x256xf32> -> vector<8x256xf32>
    %153 = arith.index_cast %c6_i32 : i32 to index
    %c0_38 = arith.constant 0 : index
    %c0_39 = arith.constant 0 : index
    %154 = vector.load %arg1[%153, %c0_38, %c0_39] : memref<8x8x256xf32, #tpu.memory_space<vmem>>, vector<1x8x256xf32>
    %155 = vector.shape_cast %154 : vector<1x8x256xf32> to vector<8x256xf32>
    %156 = arith.addf %155, %152 : vector<8x256xf32>
    %157 = vector.extract_strided_slice %156 {offsets = [0, 0], sizes = [8, 192], strides = [1, 1]} : vector<8x256xf32> to vector<8x192xf32>
    %158 = arith.negf %157 : vector<8x192xf32>
    %159 = math.exp %158 : vector<8x192xf32>
    %cst_40 = arith.constant 1.000000e+00 : f32
    %160 = vector.broadcast %cst_40 : f32 to vector<8x192xf32>
    %161 = arith.addf %160, %159 : vector<8x192xf32>
    %162 = arith.divf %160, %161 : vector<8x192xf32>
    %163 = vector.extract_strided_slice %156 {offsets = [0, 192], sizes = [8, 64], strides = [1, 1]} : vector<8x256xf32> to vector<8x64xf32>
    %164 = math.tanh %163 : vector<8x64xf32>
    %165 = vector.extract_strided_slice %162 {offsets = [0, 0], sizes = [8, 64], strides = [1, 1]} : vector<8x192xf32> to vector<8x64xf32>
    %166 = vector.extract_strided_slice %162 {offsets = [0, 64], sizes = [8, 64], strides = [1, 1]} : vector<8x192xf32> to vector<8x64xf32>
    %167 = vector.extract_strided_slice %162 {offsets = [0, 128], sizes = [8, 64], strides = [1, 1]} : vector<8x192xf32> to vector<8x64xf32>
    %168 = arith.mulf %166, %145 : vector<8x64xf32>
    %169 = arith.mulf %165, %164 : vector<8x64xf32>
    %170 = arith.addf %168, %169 : vector<8x64xf32>
    %171 = math.tanh %170 : vector<8x64xf32>
    %172 = arith.mulf %167, %171 : vector<8x64xf32>
    %173 = arith.index_cast %c6_i32 : i32 to index
    %c0_41 = arith.constant 0 : index
    %c0_42 = arith.constant 0 : index
    %174 = vector.load %arg3[%173, %c0_41, %c0_42] : memref<8x8x64xf32, #tpu.memory_space<vmem>>, vector<1x8x64xf32>
    %175 = vector.shape_cast %174 : vector<1x8x64xf32> to vector<8x64xf32>
    %176 = vector.shape_cast %172 : vector<8x64xf32> to vector<1x8x64xf32>
    tpu.vector_store %arg3[%173, %c0_41, %c0_42], %176 {strides = array<i32>} : memref<8x8x64xf32, #tpu.memory_space<vmem>>, vector<1x8x64xf32>,
    %c7_i32 = arith.constant 7 : i32
    %cst_43 = arith.constant dense<0.000000e+00> : vector<8x256xf32>
    %177 = tpu.matmul %172, %0, %cst_43 {dimension_numbers = #tpu.dot_dimension_numbers<[1], [0], [0], [1], [0, 0, 1, 1], [], []>} : vector<8x64xf32>, vector<64x256xf32>, vector<8x256xf32> -> vector<8x256xf32>
    %178 = arith.index_cast %c7_i32 : i32 to index
    %c0_44 = arith.constant 0 : index
    %c0_45 = arith.constant 0 : index
    %179 = vector.load %arg1[%178, %c0_44, %c0_45] : memref<8x8x256xf32, #tpu.memory_space<vmem>>, vector<1x8x256xf32>
    %180 = vector.shape_cast %179 : vector<1x8x256xf32> to vector<8x256xf32>
    %181 = arith.addf %180, %177 : vector<8x256xf32>
    %182 = vector.extract_strided_slice %181 {offsets = [0, 0], sizes = [8, 192], strides = [1, 1]} : vector<8x256xf32> to vector<8x192xf32>
    %183 = arith.negf %182 : vector<8x192xf32>
    %184 = math.exp %183 : vector<8x192xf32>
    %cst_46 = arith.constant 1.000000e+00 : f32
    %185 = vector.broadcast %cst_46 : f32 to vector<8x192xf32>
    %186 = arith.addf %185, %184 : vector<8x192xf32>
    %187 = arith.divf %185, %186 : vector<8x192xf32>
    %188 = vector.extract_strided_slice %181 {offsets = [0, 192], sizes = [8, 64], strides = [1, 1]} : vector<8x256xf32> to vector<8x64xf32>
    %189 = math.tanh %188 : vector<8x64xf32>
    %190 = vector.extract_strided_slice %187 {offsets = [0, 0], sizes = [8, 64], strides = [1, 1]} : vector<8x192xf32> to vector<8x64xf32>
    %191 = vector.extract_strided_slice %187 {offsets = [0, 64], sizes = [8, 64], strides = [1, 1]} : vector<8x192xf32> to vector<8x64xf32>
    %192 = vector.extract_strided_slice %187 {offsets = [0, 128], sizes = [8, 64], strides = [1, 1]} : vector<8x192xf32> to vector<8x64xf32>
    %193 = arith.mulf %191, %170 : vector<8x64xf32>
    %194 = arith.mulf %190, %189 : vector<8x64xf32>
    %195 = arith.addf %193, %194 : vector<8x64xf32>
    %196 = math.tanh %195 : vector<8x64xf32>
    %197 = arith.mulf %192, %196 : vector<8x64xf32>
    %198 = arith.index_cast %c7_i32 : i32 to index
    %c0_47 = arith.constant 0 : index
    %c0_48 = arith.constant 0 : index
    %199 = vector.load %arg3[%198, %c0_47, %c0_48] : memref<8x8x64xf32, #tpu.memory_space<vmem>>, vector<1x8x64xf32>
    %200 = vector.shape_cast %199 : vector<1x8x64xf32> to vector<8x64xf32>
    %201 = vector.shape_cast %197 : vector<8x64xf32> to vector<1x8x64xf32>
    tpu.vector_store %arg3[%198, %c0_47, %c0_48], %201 {strides = array<i32>} : memref<8x8x64xf32, #tpu.memory_space<vmem>>, vector<1x8x64xf32>,
    %c8_i32 = arith.constant 8 : i32
    return
  }
  func.func @transform_0(%arg0: i32) -> (i32, i32, i32) {
    %c0_i32 = arith.constant 0 : i32
    %c0_i32_0 = arith.constant 0 : i32
    %c0_i32_1 = arith.constant 0 : i32
    return %c0_i32, %arg0, %c0_i32_0 : i32, i32, i32
  }
  func.func @transform_1(%arg0: i32) -> (i32, i32) {
    %c0_i32 = arith.constant 0 : i32
    %c0_i32_0 = arith.constant 0 : i32
    %c0_i32_1 = arith.constant 0 : i32
    return %c0_i32, %c0_i32_0 : i32, i32
  }
  func.func @transform_2(%arg0: i32) -> (i32, i32, i32) {
    %c0_i32 = arith.constant 0 : i32
    %c0_i32_0 = arith.constant 0 : i32
    %c0_i32_1 = arith.constant 0 : i32
    return %c0_i32, %arg0, %c0_i32_0 : i32, i32, i32
  }
}

</mosaic_0001>

<llo_original>
// kernel: single_rnn_forward.1
$region0: #{single_rnn_forward.1}
  #allocation0 [shape = 'u32[]', space=smem, size = 0x4, offset = 0x4, fixed_abs, tag = 'smem constant byte address 0x4 - core index']
  #allocation1 [shape = 'u32[144,128]{1,0:T(1,128)}', space=vmem, size = 0x12000, scoped, tag = 'internal scratch']
  %s0 = inlined_call_operand.vmem [shape: f32[8,8,256], index: 0, kind: input, shape index: {}]
  %s1 = inlined_call_operand.vmem [shape: f32[64,256], index: 1, kind: input, shape index: {}]
  %s2 = inlined_call_operand.vmem [shape: f32[8,8,64], index: 2, kind: output, shape index: {}]
  %s3 = sld [smem:[#allocation0]]
  $region18: #{single_rnn_forward.1} parent=0
    _
  %s5 = ssub.s32 1, %s3
  %s6 = scalar_select 0, %s5, %s3
  // Predicated region
  $region2: #{single_rnn_forward.1} parent=0 // pred_check
    _
  $region3: #{single_rnn_forward.1} parent=0 // pred_check_branch
    %8 = sbr.rel (0) target = $region5
  $region4: #{single_rnn_forward.1} parent=0 // pred_region
    _
  $region5: #{single_rnn_forward.1} parent=0 // pred_fallthru
    _
  // Predicated region
  $region6: #{single_rnn_forward.1} parent=0 // pred_check
    _
  $region7: #{single_rnn_forward.1} parent=0 // pred_check_branch
    %10 = sbr.rel (0) target = $region9
  $region8: #{single_rnn_forward.1} parent=0 // pred_region
    _
  $region9: #{single_rnn_forward.1} parent=0 // pred_fallthru
    _
  %v11 = vld [vmem:[%s1] sm:$0xff]
  %v12 = vld [vmem:[%s1 + $0x8] sm:$0xff]
  %v13 = vld [vmem:[%s1 + $0x10] sm:$0xff]
  %v14 = vld [vmem:[%s1 + $0x18] sm:$0xff]
  %v15 = vld [vmem:[%s1 + $0x20] sm:$0xff]
  %v16 = vld [vmem:[%s1 + $0x28] sm:$0xff]
  %v17 = vld [vmem:[%s1 + $0x30] sm:$0xff]
  %v18 = vld [vmem:[%s1 + $0x38] sm:$0xff]
  %v19 = vld [vmem:[%s1 + $0x40] sm:$0xff]
  %v20 = vld [vmem:[%s1 + $0x48] sm:$0xff]
  %v21 = vld [vmem:[%s1 + $0x50] sm:$0xff]
  %v22 = vld [vmem:[%s1 + $0x58] sm:$0xff]
  %v23 = vld [vmem:[%s1 + $0x60] sm:$0xff]
  %v24 = vld [vmem:[%s1 + $0x68] sm:$0xff]
  %v25 = vld [vmem:[%s1 + $0x70] sm:$0xff]
  %v26 = vld [vmem:[%s1 + $0x78] sm:$0xff]
  %vm27 = vcmask 523264
  %v29 = vsel %vm27, 0.0, 0
  %31 = vmatprep.subr.mxu0 %v12
  %32 = vmatpush1.msra.mxu0 %v11
  %33 = vmatprep.subr.mxu0 %v14
  %34 = vmatpush1.msra.mxu0 %v13
  %35 = vmatprep.subr.mxu0 %v16
  %36 = vmatpush1.msra.mxu0 %v15
  %37 = vmatprep.subr.mxu0 %v18
  %38 = vmatpush1.msra.mxu0 %v17
  %39 = vmatprep.subr.mxu0 %v20
  %40 = vmatpush1.msra.mxu0 %v19
  %41 = vmatprep.subr.mxu0 %v22
  %42 = vmatpush1.msra.mxu0 %v21
  %43 = vmatprep.subr.mxu0 %v24
  %44 = vmatpush1.msra.mxu0 %v23
  %45 = vmatprep.subr.mxu0 %v26
  %46 = vmatpush1.msra.mxu0 %v25
  %47 = vmatprep.subr.mxu0 0.0
  %48 = vmatpush1.msra.mxu0 0.0
  %49 = vmatprep.subr.mxu0 0.0
  %50 = vmatpush1.msra.mxu0 0.0
  %51 = vmatprep.subr.mxu0 0.0
  %52 = vmatpush1.msra.mxu0 0.0
  %53 = vmatprep.subr.mxu0 0.0
  %54 = vmatpush1.msra.mxu0 0.0
  %55 = vmatprep.subr.mxu0 0.0
  %56 = vmatpush1.msra.mxu0 0.0
  %57 = vmatprep.subr.mxu0 0.0
  %58 = vmatpush1.msra.mxu0 0.0
  %59 = vmatprep.subr.mxu0 0.0
  %60 = vmatpush1.msra.mxu0 0.0
  %61 = vmatprep.subr.mxu0 0.0
  %62 = vmatpush1.msra.mxu0 0.0
  %63 = vmatprep.subr.mxu0 0.0
  %64 = vmatpush1.msra.mxu0 0.0
  %65 = vmatprep.subr.mxu0 0.0
  %66 = vmatpush1.msra.mxu0 0.0
  %67 = vmatprep.subr.mxu0 0.0
  %68 = vmatpush1.msra.mxu0 0.0
  %69 = vmatprep.subr.mxu0 0.0
  %70 = vmatpush1.msra.mxu0 0.0
  %71 = vmatprep.subr.mxu0 0.0
  %72 = vmatpush1.msra.mxu0 0.0
  %73 = vmatprep.subr.mxu0 0.0
  %74 = vmatpush1.msra.mxu0 0.0
  %75 = vmatprep.subr.mxu0 0.0
  %76 = vmatpush1.msra.mxu0 0.0
  %77 = vmatprep.subr.mxu0 0.0
  %78 = vmatpush1.msra.mxu0 0.0
  %79 = vmatprep.subr.mxu0 0.0
  %80 = vmatpush1.msra.mxu0 0.0
  %81 = vmatprep.subr.mxu0 0.0
  %82 = vmatpush1.msra.mxu0 0.0
  %83 = vmatprep.subr.mxu0 0.0
  %84 = vmatpush1.msra.mxu0 0.0
  %85 = vmatprep.subr.mxu0 0.0
  %86 = vmatpush1.msra.mxu0 0.0
  %87 = vmatprep.subr.mxu0 0.0
  %88 = vmatpush1.msra.mxu0 0.0
  %89 = vmatprep.subr.mxu0 0.0
  %90 = vmatpush1.msra.mxu0 0.0
  %91 = vmatprep.subr.mxu0 0.0
  %92 = vmatpush1.msra.mxu0 0.0
  %93 = vmatprep.subr.mxu0 0.0
  %94 = vmatpush1.msra.mxu0 0.0
  %95 = vmatprep.mubr.f32.mxu0 0.0
  %96 = vmatmul.mubr.f32.gmra.mrb[0].mxu0 %v29
  %v97 = vpop.f32.mrb[0].mxu0
  %v98 = vadd.f32 0.0, %v97
  %v99 = vpop.f32.mrb[0].mxu0
  %v100 = vadd.f32 0.0, %v99
  %101 = vdwg.mxu0
  %v102 = vld [vmem:[%s0] sm:$0xff]
  %v103 = vld [vmem:[%s0 + $0x8] sm:$0xff]
  %v104 = vadd.f32 %v102, %v98
  %v105 = vadd.f32 %v103, %v100
  %v106 = vxor.u32 %v104, 2147483648
  %v107 = vxor.u32 %v105, 2147483648
  %v108 = vmul.f32 %v106, 1.442695
  %v109 = vpow.pop %v108
  %v110 = vmul.f32 %v107, 1.442695
  %v111 = vpow.pop %v110
  %v112 = vadd.f32 %v109, 1.0
  %v113 = vadd.f32 %v111, 1.0
  %v114 = vrcp.pop %v112
  %v115 = vmul.f32 1.0, %v114
  %v116 = vrcp.pop %v113
  %v117 = vmul.f32 1.0, %v116
  %v118 = vtanh.pop %v105
  %v119 = vmul.f32 %v115, 0.0
  %121 = vrot.lane.b32.xlu0 %v118, 64
  %v122 = vpop.permute.xlu0 %121
  %v124 = vmul.f32 %v115, %v122
  %126 = vrot.lane.b32.xlu0 %v124, 64
  %v127 = vpop.permute.xlu0 %126
  %v129 = vadd.f32 %v119, %v127
  %v130 = vtanh.pop %v129
  %132 = vrot.lane.b32.xlu0 %v130, 64
  %v133 = vpop.permute.xlu0 %132
  %v135 = vmul.f32 %v117, %v133
  %136 = vst.msk [vmem:[%s2] sm:$0xff] %vm27, %v135
  %v138 = vsel %vm27, %v135, 0
  %140 = vmatprep.subr.mxu0 %v12
  %141 = vmatpush1.msra.mxu0 %v11
  %142 = vmatprep.subr.mxu0 %v14
  %143 = vmatpush1.msra.mxu0 %v13
  %144 = vmatprep.subr.mxu0 %v16
  %145 = vmatpush1.msra.mxu0 %v15
  %146 = vmatprep.subr.mxu0 %v18
  %147 = vmatpush1.msra.mxu0 %v17
  %148 = vmatprep.subr.mxu0 %v20
  %149 = vmatpush1.msra.mxu0 %v19
  %150 = vmatprep.subr.mxu0 %v22
  %151 = vmatpush1.msra.mxu0 %v21
  %152 = vmatprep.subr.mxu0 %v24
  %153 = vmatpush1.msra.mxu0 %v23
  %154 = vmatprep.subr.mxu0 %v26
  %155 = vmatpush1.msra.mxu0 %v25
  %156 = vmatprep.subr.mxu0 0.0
  %157 = vmatpush1.msra.mxu0 0.0
  %158 = vmatprep.subr.mxu0 0.0
  %159 = vmatpush1.msra.mxu0 0.0
  %160 = vmatprep.subr.mxu0 0.0
  %161 = vmatpush1.msra.mxu0 0.0
  %162 = vmatprep.subr.mxu0 0.0
  %163 = vmatpush1.msra.mxu0 0.0
  %164 = vmatprep.subr.mxu0 0.0
  %165 = vmatpush1.msra.mxu0 0.0
  %166 = vmatprep.subr.mxu0 0.0
  %167 = vmatpush1.msra.mxu0 0.0
  %168 = vmatprep.subr.mxu0 0.0
  %169 = vmatpush1.msra.mxu0 0.0
  %170 = vmatprep.subr.mxu0 0.0
  %171 = vmatpush1.msra.mxu0 0.0
  %172 = vmatprep.subr.mxu0 0.0
  %173 = vmatpush1.msra.mxu0 0.0
  %174 = vmatprep.subr.mxu0 0.0
  %175 = vmatpush1.msra.mxu0 0.0
  %176 = vmatprep.subr.mxu0 0.0
  %177 = vmatpush1.msra.mxu0 0.0
  %178 = vmatprep.subr.mxu0 0.0
  %179 = vmatpush1.msra.mxu0 0.0
  %180 = vmatprep.subr.mxu0 0.0
  %181 = vmatpush1.msra.mxu0 0.0
  %182 = vmatprep.subr.mxu0 0.0
  %183 = vmatpush1.msra.mxu0 0.0
  %184 = vmatprep.subr.mxu0 0.0
  %185 = vmatpush1.msra.mxu0 0.0
  %186 = vmatprep.subr.mxu0 0.0
  %187 = vmatpush1.msra.mxu0 0.0
  %188 = vmatprep.subr.mxu0 0.0
  %189 = vmatpush1.msra.mxu0 0.0
  %190 = vmatprep.subr.mxu0 0.0
  %191 = vmatpush1.msra.mxu0 0.0
  %192 = vmatprep.subr.mxu0 0.0
  %193 = vmatpush1.msra.mxu0 0.0
  %194 = vmatprep.subr.mxu0 0.0
  %195 = vmatpush1.msra.mxu0 0.0
  %196 = vmatprep.subr.mxu0 0.0
  %197 = vmatpush1.msra.mxu0 0.0
  %198 = vmatprep.subr.mxu0 0.0
  %199 = vmatpush1.msra.mxu0 0.0
  %200 = vmatprep.subr.mxu0 0.0
  %201 = vmatpush1.msra.mxu0 0.0
  %202 = vmatprep.subr.mxu0 0.0
  %203 = vmatpush1.msra.mxu0 0.0
  %204 = vmatprep.mubr.f32.mxu0 0.0
  %205 = vmatmul.mubr.f32.gmra.mrb[0].mxu0 %v138
  %v206 = vpop.f32.mrb[0].mxu0
  %v207 = vadd.f32 0.0, %v206
  %v208 = vpop.f32.mrb[0].mxu0
  %v209 = vadd.f32 0.0, %v208
  %210 = vdwg.mxu0
  %s211 = scalar_lea.vmem %s0, 16
  %v212 = vld [vmem:[%s211] sm:$0xff]
  %v213 = vld [vmem:[%s211 + $0x8] sm:$0xff]
  %v214 = vadd.f32 %v212, %v207
  %v215 = vadd.f32 %v213, %v209
  %v216 = vxor.u32 %v214, 2147483648
  %v217 = vxor.u32 %v215, 2147483648
  %v218 = vmul.f32 %v216, 1.442695
  %v219 = vpow.pop %v218
  %v220 = vmul.f32 %v217, 1.442695
  %v221 = vpow.pop %v220
  %v222 = vadd.f32 %v219, 1.0
  %v223 = vadd.f32 %v221, 1.0
  %v224 = vrcp.pop %v222
  %v225 = vmul.f32 1.0, %v224
  %v226 = vrcp.pop %v223
  %v227 = vmul.f32 1.0, %v226
  %v228 = vtanh.pop %v215
  %v229 = vmul.f32 %v225, %v129
  %231 = vrot.lane.b32.xlu0 %v228, 64
  %v232 = vpop.permute.xlu0 %231
  %v234 = vmul.f32 %v225, %v232
  %236 = vrot.lane.b32.xlu0 %v234, 64
  %v237 = vpop.permute.xlu0 %236
  %v239 = vadd.f32 %v229, %v237
  %v240 = vtanh.pop %v239
  %242 = vrot.lane.b32.xlu0 %v240, 64
  %v243 = vpop.permute.xlu0 %242
  %v245 = vmul.f32 %v227, %v243
  %s246 = scalar_lea.vmem %s2, 8
  %247 = vst.msk [vmem:[%s246] sm:$0xff] %vm27, %v245
  %v249 = vsel %vm27, %v245, 0
  %251 = vmatprep.subr.mxu0 %v12
  %252 = vmatpush1.msra.mxu0 %v11
  %253 = vmatprep.subr.mxu0 %v14
  %254 = vmatpush1.msra.mxu0 %v13
  %255 = vmatprep.subr.mxu0 %v16
  %256 = vmatpush1.msra.mxu0 %v15
  %257 = vmatprep.subr.mxu0 %v18
  %258 = vmatpush1.msra.mxu0 %v17
  %259 = vmatprep.subr.mxu0 %v20
  %260 = vmatpush1.msra.mxu0 %v19
  %261 = vmatprep.subr.mxu0 %v22
  %262 = vmatpush1.msra.mxu0 %v21
  %263 = vmatprep.subr.mxu0 %v24
  %264 = vmatpush1.msra.mxu0 %v23
  %265 = vmatprep.subr.mxu0 %v26
  %266 = vmatpush1.msra.mxu0 %v25
  %267 = vmatprep.subr.mxu0 0.0
  %268 = vmatpush1.msra.mxu0 0.0
  %269 = vmatprep.subr.mxu0 0.0
  %270 = vmatpush1.msra.mxu0 0.0
  %271 = vmatprep.subr.mxu0 0.0
  %272 = vmatpush1.msra.mxu0 0.0
  %273 = vmatprep.subr.mxu0 0.0
  %274 = vmatpush1.msra.mxu0 0.0
  %275 = vmatprep.subr.mxu0 0.0
  %276 = vmatpush1.msra.mxu0 0.0
  %277 = vmatprep.subr.mxu0 0.0
  %278 = vmatpush1.msra.mxu0 0.0
  %279 = vmatprep.subr.mxu0 0.0
  %280 = vmatpush1.msra.mxu0 0.0
  %281 = vmatprep.subr.mxu0 0.0
  %282 = vmatpush1.msra.mxu0 0.0
  %283 = vmatprep.subr.mxu0 0.0
  %284 = vmatpush1.msra.mxu0 0.0
  %285 = vmatprep.subr.mxu0 0.0
  %286 = vmatpush1.msra.mxu0 0.0
  %287 = vmatprep.subr.mxu0 0.0
  %288 = vmatpush1.msra.mxu0 0.0
  %289 = vmatprep.subr.mxu0 0.0
  %290 = vmatpush1.msra.mxu0 0.0
  %291 = vmatprep.subr.mxu0 0.0
  %292 = vmatpush1.msra.mxu0 0.0
  %293 = vmatprep.subr.mxu0 0.0
  %294 = vmatpush1.msra.mxu0 0.0
  %295 = vmatprep.subr.mxu0 0.0
  %296 = vmatpush1.msra.mxu0 0.0
  %297 = vmatprep.subr.mxu0 0.0
  %298 = vmatpush1.msra.mxu0 0.0
  %299 = vmatprep.subr.mxu0 0.0
  %300 = vmatpush1.msra.mxu0 0.0
  %301 = vmatprep.subr.mxu0 0.0
  %302 = vmatpush1.msra.mxu0 0.0
  %303 = vmatprep.subr.mxu0 0.0
  %304 = vmatpush1.msra.mxu0 0.0
  %305 = vmatprep.subr.mxu0 0.0
  %306 = vmatpush1.msra.mxu0 0.0
  %307 = vmatprep.subr.mxu0 0.0
  %308 = vmatpush1.msra.mxu0 0.0
  %309 = vmatprep.subr.mxu0 0.0
  %310 = vmatpush1.msra.mxu0 0.0
  %311 = vmatprep.subr.mxu0 0.0
  %312 = vmatpush1.msra.mxu0 0.0
  %313 = vmatprep.subr.mxu0 0.0
  %314 = vmatpush1.msra.mxu0 0.0
  %315 = vmatprep.mubr.f32.mxu0 0.0
  %316 = vmatmul.mubr.f32.gmra.mrb[0].mxu0 %v249
  %v317 = vpop.f32.mrb[0].mxu0
  %v318 = vadd.f32 0.0, %v317
  %v319 = vpop.f32.mrb[0].mxu0
  %v320 = vadd.f32 0.0, %v319
  %321 = vdwg.mxu0
  %s322 = scalar_lea.vmem %s0, 32
  %v323 = vld [vmem:[%s322] sm:$0xff]
  %v324 = vld [vmem:[%s322 + $0x8] sm:$0xff]
  %v325 = vadd.f32 %v323, %v318
  %v326 = vadd.f32 %v324, %v320
  %v327 = vxor.u32 %v325, 2147483648
  %v328 = vxor.u32 %v326, 2147483648
  %v329 = vmul.f32 %v327, 1.442695
  %v330 = vpow.pop %v329
  %v331 = vmul.f32 %v328, 1.442695
  %v332 = vpow.pop %v331
  %v333 = vadd.f32 %v330, 1.0
  %v334 = vadd.f32 %v332, 1.0
  %v335 = vrcp.pop %v333
  %v336 = vmul.f32 1.0, %v335
  %v337 = vrcp.pop %v334
  %v338 = vmul.f32 1.0, %v337
  %v339 = vtanh.pop %v326
  %v340 = vmul.f32 %v336, %v239
  %342 = vrot.lane.b32.xlu0 %v339, 64
  %v343 = vpop.permute.xlu0 %342
  %v345 = vmul.f32 %v336, %v343
  %347 = vrot.lane.b32.xlu0 %v345, 64
  %v348 = vpop.permute.xlu0 %347
  %v350 = vadd.f32 %v340, %v348
  %v351 = vtanh.pop %v350
  %353 = vrot.lane.b32.xlu0 %v351, 64
  %v354 = vpop.permute.xlu0 %353
  %v356 = vmul.f32 %v338, %v354
  %s357 = scalar_lea.vmem %s2, 16
  %358 = vst.msk [vmem:[%s357] sm:$0xff] %vm27, %v356
  %v360 = vsel %vm27, %v356, 0
  %362 = vmatprep.subr.mxu0 %v12
  %363 = vmatpush1.msra.mxu0 %v11
  %364 = vmatprep.subr.mxu0 %v14
  %365 = vmatpush1.msra.mxu0 %v13
  %366 = vmatprep.subr.mxu0 %v16
  %367 = vmatpush1.msra.mxu0 %v15
  %368 = vmatprep.subr.mxu0 %v18
  %369 = vmatpush1.msra.mxu0 %v17
  %370 = vmatprep.subr.mxu0 %v20
  %371 = vmatpush1.msra.mxu0 %v19
  %372 = vmatprep.subr.mxu0 %v22
  %373 = vmatpush1.msra.mxu0 %v21
  %374 = vmatprep.subr.mxu0 %v24
  %375 = vmatpush1.msra.mxu0 %v23
  %376 = vmatprep.subr.mxu0 %v26
  %377 = vmatpush1.msra.mxu0 %v25
  %378 = vmatprep.subr.mxu0 0.0
  %379 = vmatpush1.msra.mxu0 0.0
  %380 = vmatprep.subr.mxu0 0.0
  %381 = vmatpush1.msra.mxu0 0.0
  %382 = vmatprep.subr.mxu0 0.0
  %383 = vmatpush1.msra.mxu0 0.0
  %384 = vmatprep.subr.mxu0 0.0
  %385 = vmatpush1.msra.mxu0 0.0
  %386 = vmatprep.subr.mxu0 0.0
  %387 = vmatpush1.msra.mxu0 0.0
  %388 = vmatprep.subr.mxu0 0.0
  %389 = vmatpush1.msra.mxu0 0.0
  %390 = vmatprep.subr.mxu0 0.0
  %391 = vmatpush1.msra.mxu0 0.0
  %392 = vmatprep.subr.mxu0 0.0
  %393 = vmatpush1.msra.mxu0 0.0
  %394 = vmatprep.subr.mxu0 0.0
  %395 = vmatpush1.msra.mxu0 0.0
  %396 = vmatprep.subr.mxu0 0.0
  %397 = vmatpush1.msra.mxu0 0.0
  %398 = vmatprep.subr.mxu0 0.0
  %399 = vmatpush1.msra.mxu0 0.0
  %400 = vmatprep.subr.mxu0 0.0
  %401 = vmatpush1.msra.mxu0 0.0
  %402 = vmatprep.subr.mxu0 0.0
  %403 = vmatpush1.msra.mxu0 0.0
  %404 = vmatprep.subr.mxu0 0.0
  %405 = vmatpush1.msra.mxu0 0.0
  %406 = vmatprep.subr.mxu0 0.0
  %407 = vmatpush1.msra.mxu0 0.0
  %408 = vmatprep.subr.mxu0 0.0
  %409 = vmatpush1.msra.mxu0 0.0
  %410 = vmatprep.subr.mxu0 0.0
  %411 = vmatpush1.msra.mxu0 0.0
  %412 = vmatprep.subr.mxu0 0.0
  %413 = vmatpush1.msra.mxu0 0.0
  %414 = vmatprep.subr.mxu0 0.0
  %415 = vmatpush1.msra.mxu0 0.0
  %416 = vmatprep.subr.mxu0 0.0
  %417 = vmatpush1.msra.mxu0 0.0
  %418 = vmatprep.subr.mxu0 0.0
  %419 = vmatpush1.msra.mxu0 0.0
  %420 = vmatprep.subr.mxu0 0.0
  %421 = vmatpush1.msra.mxu0 0.0
  %422 = vmatprep.subr.mxu0 0.0
  %423 = vmatpush1.msra.mxu0 0.0
  %424 = vmatprep.subr.mxu0 0.0
  %425 = vmatpush1.msra.mxu0 0.0
  %426 = vmatprep.mubr.f32.mxu0 0.0
  %427 = vmatmul.mubr.f32.gmra.mrb[0].mxu0 %v360
  %v428 = vpop.f32.mrb[0].mxu0
  %v429 = vadd.f32 0.0, %v428
  %v430 = vpop.f32.mrb[0].mxu0
  %v431 = vadd.f32 0.0, %v430
  %432 = vdwg.mxu0
  %s433 = scalar_lea.vmem %s0, 48
  %v434 = vld [vmem:[%s433] sm:$0xff]
  %v435 = vld [vmem:[%s433 + $0x8] sm:$0xff]
  %v436 = vadd.f32 %v434, %v429
  %v437 = vadd.f32 %v435, %v431
  %v438 = vxor.u32 %v436, 2147483648
  %v439 = vxor.u32 %v437, 2147483648
  %v440 = vmul.f32 %v438, 1.442695
  %v441 = vpow.pop %v440
  %v442 = vmul.f32 %v439, 1.442695
  %v443 = vpow.pop %v442
  %v444 = vadd.f32 %v441, 1.0
  %v445 = vadd.f32 %v443, 1.0
  %v446 = vrcp.pop %v444
  %v447 = vmul.f32 1.0, %v446
  %v448 = vrcp.pop %v445
  %v449 = vmul.f32 1.0, %v448
  %v450 = vtanh.pop %v437
  %v451 = vmul.f32 %v447, %v350
  %453 = vrot.lane.b32.xlu0 %v450, 64
  %v454 = vpop.permute.xlu0 %453
  %v456 = vmul.f32 %v447, %v454
  %458 = vrot.lane.b32.xlu0 %v456, 64
  %v459 = vpop.permute.xlu0 %458
  %v461 = vadd.f32 %v451, %v459
  %v462 = vtanh.pop %v461
  %464 = vrot.lane.b32.xlu0 %v462, 64
  %v465 = vpop.permute.xlu0 %464
  %v467 = vmul.f32 %v449, %v465
  %s468 = scalar_lea.vmem %s2, 24
  %469 = vst.msk [vmem:[%s468] sm:$0xff] %vm27, %v467
  %v471 = vsel %vm27, %v467, 0
  %473 = vmatprep.subr.mxu0 %v12
  %474 = vmatpush1.msra.mxu0 %v11
  %475 = vmatprep.subr.mxu0 %v14
  %476 = vmatpush1.msra.mxu0 %v13
  %477 = vmatprep.subr.mxu0 %v16
  %478 = vmatpush1.msra.mxu0 %v15
  %479 = vmatprep.subr.mxu0 %v18
  %480 = vmatpush1.msra.mxu0 %v17
  %481 = vmatprep.subr.mxu0 %v20
  %482 = vmatpush1.msra.mxu0 %v19
  %483 = vmatprep.subr.mxu0 %v22
  %484 = vmatpush1.msra.mxu0 %v21
  %485 = vmatprep.subr.mxu0 %v24
  %486 = vmatpush1.msra.mxu0 %v23
  %487 = vmatprep.subr.mxu0 %v26
  %488 = vmatpush1.msra.mxu0 %v25
  %489 = vmatprep.subr.mxu0 0.0
  %490 = vmatpush1.msra.mxu0 0.0
  %491 = vmatprep.subr.mxu0 0.0
  %492 = vmatpush1.msra.mxu0 0.0
  %493 = vmatprep.subr.mxu0 0.0
  %494 = vmatpush1.msra.mxu0 0.0
  %495 = vmatprep.subr.mxu0 0.0
  %496 = vmatpush1.msra.mxu0 0.0
  %497 = vmatprep.subr.mxu0 0.0
  %498 = vmatpush1.msra.mxu0 0.0
  %499 = vmatprep.subr.mxu0 0.0
  %500 = vmatpush1.msra.mxu0 0.0
  %501 = vmatprep.subr.mxu0 0.0
  %502 = vmatpush1.msra.mxu0 0.0
  %503 = vmatprep.subr.mxu0 0.0
  %504 = vmatpush1.msra.mxu0 0.0
  %505 = vmatprep.subr.mxu0 0.0
  %506 = vmatpush1.msra.mxu0 0.0
  %507 = vmatprep.subr.mxu0 0.0
  %508 = vmatpush1.msra.mxu0 0.0
  %509 = vmatprep.subr.mxu0 0.0
  %510 = vmatpush1.msra.mxu0 0.0
  %511 = vmatprep.subr.mxu0 0.0
  %512 = vmatpush1.msra.mxu0 0.0
  %513 = vmatprep.subr.mxu0 0.0
  %514 = vmatpush1.msra.mxu0 0.0
  %515 = vmatprep.subr.mxu0 0.0
  %516 = vmatpush1.msra.mxu0 0.0
  %517 = vmatprep.subr.mxu0 0.0
  %518 = vmatpush1.msra.mxu0 0.0
  %519 = vmatprep.subr.mxu0 0.0
  %520 = vmatpush1.msra.mxu0 0.0
  %521 = vmatprep.subr.mxu0 0.0
  %522 = vmatpush1.msra.mxu0 0.0
  %523 = vmatprep.subr.mxu0 0.0
  %524 = vmatpush1.msra.mxu0 0.0
  %525 = vmatprep.subr.mxu0 0.0
  %526 = vmatpush1.msra.mxu0 0.0
  %527 = vmatprep.subr.mxu0 0.0
  %528 = vmatpush1.msra.mxu0 0.0
  %529 = vmatprep.subr.mxu0 0.0
  %530 = vmatpush1.msra.mxu0 0.0
  %531 = vmatprep.subr.mxu0 0.0
  %532 = vmatpush1.msra.mxu0 0.0
  %533 = vmatprep.subr.mxu0 0.0
  %534 = vmatpush1.msra.mxu0 0.0
  %535 = vmatprep.subr.mxu0 0.0
  %536 = vmatpush1.msra.mxu0 0.0
  %537 = vmatprep.mubr.f32.mxu0 0.0
  %538 = vmatmul.mubr.f32.gmra.mrb[0].mxu0 %v471
  %v539 = vpop.f32.mrb[0].mxu0
  %v540 = vadd.f32 0.0, %v539
  %v541 = vpop.f32.mrb[0].mxu0
  %v542 = vadd.f32 0.0, %v541
  %543 = vdwg.mxu0
  %s544 = scalar_lea.vmem %s0, 64
  %v545 = vld [vmem:[%s544] sm:$0xff]
  %v546 = vld [vmem:[%s544 + $0x8] sm:$0xff]
  %v547 = vadd.f32 %v545, %v540
  %v548 = vadd.f32 %v546, %v542
  %v549 = vxor.u32 %v547, 2147483648
  %v550 = vxor.u32 %v548, 2147483648
  %v551 = vmul.f32 %v549, 1.442695
  %v552 = vpow.pop %v551
  %v553 = vmul.f32 %v550, 1.442695
  %v554 = vpow.pop %v553
  %v555 = vadd.f32 %v552, 1.0
  %v556 = vadd.f32 %v554, 1.0
  %v557 = vrcp.pop %v555
  %v558 = vmul.f32 1.0, %v557
  %v559 = vrcp.pop %v556
  %v560 = vmul.f32 1.0, %v559
  %v561 = vtanh.pop %v548
  %v562 = vmul.f32 %v558, %v461
  %564 = vrot.lane.b32.xlu0 %v561, 64
  %v565 = vpop.permute.xlu0 %564
  %v567 = vmul.f32 %v558, %v565
  %569 = vrot.lane.b32.xlu0 %v567, 64
  %v570 = vpop.permute.xlu0 %569
  %v572 = vadd.f32 %v562, %v570
  %v573 = vtanh.pop %v572
  %575 = vrot.lane.b32.xlu0 %v573, 64
  %v576 = vpop.permute.xlu0 %575
  %v578 = vmul.f32 %v560, %v576
  %s579 = scalar_lea.vmem %s2, 32
  %580 = vst.msk [vmem:[%s579] sm:$0xff] %vm27, %v578
  %v582 = vsel %vm27, %v578, 0
  %584 = vmatprep.subr.mxu0 %v12
  %585 = vmatpush1.msra.mxu0 %v11
  %586 = vmatprep.subr.mxu0 %v14
  %587 = vmatpush1.msra.mxu0 %v13
  %588 = vmatprep.subr.mxu0 %v16
  %589 = vmatpush1.msra.mxu0 %v15
  %590 = vmatprep.subr.mxu0 %v18
  %591 = vmatpush1.msra.mxu0 %v17
  %592 = vmatprep.subr.mxu0 %v20
  %593 = vmatpush1.msra.mxu0 %v19
  %594 = vmatprep.subr.mxu0 %v22
  %595 = vmatpush1.msra.mxu0 %v21
  %596 = vmatprep.subr.mxu0 %v24
  %597 = vmatpush1.msra.mxu0 %v23
  %598 = vmatprep.subr.mxu0 %v26
  %599 = vmatpush1.msra.mxu0 %v25
  %600 = vmatprep.subr.mxu0 0.0
  %601 = vmatpush1.msra.mxu0 0.0
  %602 = vmatprep.subr.mxu0 0.0
  %603 = vmatpush1.msra.mxu0 0.0
  %604 = vmatprep.subr.mxu0 0.0
  %605 = vmatpush1.msra.mxu0 0.0
  %606 = vmatprep.subr.mxu0 0.0
  %607 = vmatpush1.msra.mxu0 0.0
  %608 = vmatprep.subr.mxu0 0.0
  %609 = vmatpush1.msra.mxu0 0.0
  %610 = vmatprep.subr.mxu0 0.0
  %611 = vmatpush1.msra.mxu0 0.0
  %612 = vmatprep.subr.mxu0 0.0
  %613 = vmatpush1.msra.mxu0 0.0
  %614 = vmatprep.subr.mxu0 0.0
  %615 = vmatpush1.msra.mxu0 0.0
  %616 = vmatprep.subr.mxu0 0.0
  %617 = vmatpush1.msra.mxu0 0.0
  %618 = vmatprep.subr.mxu0 0.0
  %619 = vmatpush1.msra.mxu0 0.0
  %620 = vmatprep.subr.mxu0 0.0
  %621 = vmatpush1.msra.mxu0 0.0
  %622 = vmatprep.subr.mxu0 0.0
  %623 = vmatpush1.msra.mxu0 0.0
  %624 = vmatprep.subr.mxu0 0.0
  %625 = vmatpush1.msra.mxu0 0.0
  %626 = vmatprep.subr.mxu0 0.0
  %627 = vmatpush1.msra.mxu0 0.0
  %628 = vmatprep.subr.mxu0 0.0
  %629 = vmatpush1.msra.mxu0 0.0
  %630 = vmatprep.subr.mxu0 0.0
  %631 = vmatpush1.msra.mxu0 0.0
  %632 = vmatprep.subr.mxu0 0.0
  %633 = vmatpush1.msra.mxu0 0.0
  %634 = vmatprep.subr.mxu0 0.0
  %635 = vmatpush1.msra.mxu0 0.0
  %636 = vmatprep.subr.mxu0 0.0
  %637 = vmatpush1.msra.mxu0 0.0
  %638 = vmatprep.subr.mxu0 0.0
  %639 = vmatpush1.msra.mxu0 0.0
  %640 = vmatprep.subr.mxu0 0.0
  %641 = vmatpush1.msra.mxu0 0.0
  %642 = vmatprep.subr.mxu0 0.0
  %643 = vmatpush1.msra.mxu0 0.0
  %644 = vmatprep.subr.mxu0 0.0
  %645 = vmatpush1.msra.mxu0 0.0
  %646 = vmatprep.subr.mxu0 0.0
  %647 = vmatpush1.msra.mxu0 0.0
  %648 = vmatprep.mubr.f32.mxu0 0.0
  %649 = vmatmul.mubr.f32.gmra.mrb[0].mxu0 %v582
  %v650 = vpop.f32.mrb[0].mxu0
  %v651 = vadd.f32 0.0, %v650
  %v652 = vpop.f32.mrb[0].mxu0
  %v653 = vadd.f32 0.0, %v652
  %654 = vdwg.mxu0
  %s655 = scalar_lea.vmem %s0, 80
  %v656 = vld [vmem:[%s655] sm:$0xff]
  %v657 = vld [vmem:[%s655 + $0x8] sm:$0xff]
  %v658 = vadd.f32 %v656, %v651
  %v659 = vadd.f32 %v657, %v653
  %v660 = vxor.u32 %v658, 2147483648
  %v661 = vxor.u32 %v659, 2147483648
  %v662 = vmul.f32 %v660, 1.442695
  %v663 = vpow.pop %v662
  %v664 = vmul.f32 %v661, 1.442695
  %v665 = vpow.pop %v664
  %v666 = vadd.f32 %v663, 1.0
  %v667 = vadd.f32 %v665, 1.0
  %v668 = vrcp.pop %v666
  %v669 = vmul.f32 1.0, %v668
  %v670 = vrcp.pop %v667
  %v671 = vmul.f32 1.0, %v670
  %v672 = vtanh.pop %v659
  %v673 = vmul.f32 %v669, %v572
  %675 = vrot.lane.b32.xlu0 %v672, 64
  %v676 = vpop.permute.xlu0 %675
  %v678 = vmul.f32 %v669, %v676
  %680 = vrot.lane.b32.xlu0 %v678, 64
  %v681 = vpop.permute.xlu0 %680
  %v683 = vadd.f32 %v673, %v681
  %v684 = vtanh.pop %v683
  %686 = vrot.lane.b32.xlu0 %v684, 64
  %v687 = vpop.permute.xlu0 %686
  %v689 = vmul.f32 %v671, %v687
  %s690 = scalar_lea.vmem %s2, 40
  %691 = vst.msk [vmem:[%s690] sm:$0xff] %vm27, %v689
  %v693 = vsel %vm27, %v689, 0
  %695 = vmatprep.subr.mxu0 %v12
  %696 = vmatpush1.msra.mxu0 %v11
  %697 = vmatprep.subr.mxu0 %v14
  %698 = vmatpush1.msra.mxu0 %v13
  %699 = vmatprep.subr.mxu0 %v16
  %700 = vmatpush1.msra.mxu0 %v15
  %701 = vmatprep.subr.mxu0 %v18
  %702 = vmatpush1.msra.mxu0 %v17
  %703 = vmatprep.subr.mxu0 %v20
  %704 = vmatpush1.msra.mxu0 %v19
  %705 = vmatprep.subr.mxu0 %v22
  %706 = vmatpush1.msra.mxu0 %v21
  %707 = vmatprep.subr.mxu0 %v24
  %708 = vmatpush1.msra.mxu0 %v23
  %709 = vmatprep.subr.mxu0 %v26
  %710 = vmatpush1.msra.mxu0 %v25
  %711 = vmatprep.subr.mxu0 0.0
  %712 = vmatpush1.msra.mxu0 0.0
  %713 = vmatprep.subr.mxu0 0.0
  %714 = vmatpush1.msra.mxu0 0.0
  %715 = vmatprep.subr.mxu0 0.0
  %716 = vmatpush1.msra.mxu0 0.0
  %717 = vmatprep.subr.mxu0 0.0
  %718 = vmatpush1.msra.mxu0 0.0
  %719 = vmatprep.subr.mxu0 0.0
  %720 = vmatpush1.msra.mxu0 0.0
  %721 = vmatprep.subr.mxu0 0.0
  %722 = vmatpush1.msra.mxu0 0.0
  %723 = vmatprep.subr.mxu0 0.0
  %724 = vmatpush1.msra.mxu0 0.0
  %725 = vmatprep.subr.mxu0 0.0
  %726 = vmatpush1.msra.mxu0 0.0
  %727 = vmatprep.subr.mxu0 0.0
  %728 = vmatpush1.msra.mxu0 0.0
  %729 = vmatprep.subr.mxu0 0.0
  %730 = vmatpush1.msra.mxu0 0.0
  %731 = vmatprep.subr.mxu0 0.0
  %732 = vmatpush1.msra.mxu0 0.0
  %733 = vmatprep.subr.mxu0 0.0
  %734 = vmatpush1.msra.mxu0 0.0
  %735 = vmatprep.subr.mxu0 0.0
  %736 = vmatpush1.msra.mxu0 0.0
  %737 = vmatprep.subr.mxu0 0.0
  %738 = vmatpush1.msra.mxu0 0.0
  %739 = vmatprep.subr.mxu0 0.0
  %740 = vmatpush1.msra.mxu0 0.0
  %741 = vmatprep.subr.mxu0 0.0
  %742 = vmatpush1.msra.mxu0 0.0
  %743 = vmatprep.subr.mxu0 0.0
  %744 = vmatpush1.msra.mxu0 0.0
  %745 = vmatprep.subr.mxu0 0.0
  %746 = vmatpush1.msra.mxu0 0.0
  %747 = vmatprep.subr.mxu0 0.0
  %748 = vmatpush1.msra.mxu0 0.0
  %749 = vmatprep.subr.mxu0 0.0
  %750 = vmatpush1.msra.mxu0 0.0
  %751 = vmatprep.subr.mxu0 0.0
  %752 = vmatpush1.msra.mxu0 0.0
  %753 = vmatprep.subr.mxu0 0.0
  %754 = vmatpush1.msra.mxu0 0.0
  %755 = vmatprep.subr.mxu0 0.0
  %756 = vmatpush1.msra.mxu0 0.0
  %757 = vmatprep.subr.mxu0 0.0
  %758 = vmatpush1.msra.mxu0 0.0
  %759 = vmatprep.mubr.f32.mxu0 0.0
  %760 = vmatmul.mubr.f32.gmra.mrb[0].mxu0 %v693
  %v761 = vpop.f32.mrb[0].mxu0
  %v762 = vadd.f32 0.0, %v761
  %v763 = vpop.f32.mrb[0].mxu0
  %v764 = vadd.f32 0.0, %v763
  %765 = vdwg.mxu0
  %s766 = scalar_lea.vmem %s0, 96
  %v767 = vld [vmem:[%s766] sm:$0xff]
  %v768 = vld [vmem:[%s766 + $0x8] sm:$0xff]
  %v769 = vadd.f32 %v767, %v762
  %v770 = vadd.f32 %v768, %v764
  %v771 = vxor.u32 %v769, 2147483648
  %v772 = vxor.u32 %v770, 2147483648
  %v773 = vmul.f32 %v771, 1.442695
  %v774 = vpow.pop %v773
  %v775 = vmul.f32 %v772, 1.442695
  %v776 = vpow.pop %v775
  %v777 = vadd.f32 %v774, 1.0
  %v778 = vadd.f32 %v776, 1.0
  %v779 = vrcp.pop %v777
  %v780 = vmul.f32 1.0, %v779
  %v781 = vrcp.pop %v778
  %v782 = vmul.f32 1.0, %v781
  %v783 = vtanh.pop %v770
  %v784 = vmul.f32 %v780, %v683
  %786 = vrot.lane.b32.xlu0 %v783, 64
  %v787 = vpop.permute.xlu0 %786
  %v789 = vmul.f32 %v780, %v787
  %791 = vrot.lane.b32.xlu0 %v789, 64
  %v792 = vpop.permute.xlu0 %791
  %v794 = vadd.f32 %v784, %v792
  %v795 = vtanh.pop %v794
  %797 = vrot.lane.b32.xlu0 %v795, 64
  %v798 = vpop.permute.xlu0 %797
  %v800 = vmul.f32 %v782, %v798
  %s801 = scalar_lea.vmem %s2, 48
  %802 = vst.msk [vmem:[%s801] sm:$0xff] %vm27, %v800
  %v804 = vsel %vm27, %v800, 0
  %806 = vmatprep.subr.mxu0 %v12
  %807 = vmatpush1.msra.mxu0 %v11
  %808 = vmatprep.subr.mxu0 %v14
  %809 = vmatpush1.msra.mxu0 %v13
  %810 = vmatprep.subr.mxu0 %v16
  %811 = vmatpush1.msra.mxu0 %v15
  %812 = vmatprep.subr.mxu0 %v18
  %813 = vmatpush1.msra.mxu0 %v17
  %814 = vmatprep.subr.mxu0 %v20
  %815 = vmatpush1.msra.mxu0 %v19
  %816 = vmatprep.subr.mxu0 %v22
  %817 = vmatpush1.msra.mxu0 %v21
  %818 = vmatprep.subr.mxu0 %v24
  %819 = vmatpush1.msra.mxu0 %v23
  %820 = vmatprep.subr.mxu0 %v26
  %821 = vmatpush1.msra.mxu0 %v25
  %822 = vmatprep.subr.mxu0 0.0
  %823 = vmatpush1.msra.mxu0 0.0
  %824 = vmatprep.subr.mxu0 0.0
  %825 = vmatpush1.msra.mxu0 0.0
  %826 = vmatprep.subr.mxu0 0.0
  %827 = vmatpush1.msra.mxu0 0.0
  %828 = vmatprep.subr.mxu0 0.0
  %829 = vmatpush1.msra.mxu0 0.0
  %830 = vmatprep.subr.mxu0 0.0
  %831 = vmatpush1.msra.mxu0 0.0
  %832 = vmatprep.subr.mxu0 0.0
  %833 = vmatpush1.msra.mxu0 0.0
  %834 = vmatprep.subr.mxu0 0.0
  %835 = vmatpush1.msra.mxu0 0.0
  %836 = vmatprep.subr.mxu0 0.0
  %837 = vmatpush1.msra.mxu0 0.0
  %838 = vmatprep.subr.mxu0 0.0
  %839 = vmatpush1.msra.mxu0 0.0
  %840 = vmatprep.subr.mxu0 0.0
  %841 = vmatpush1.msra.mxu0 0.0
  %842 = vmatprep.subr.mxu0 0.0
  %843 = vmatpush1.msra.mxu0 0.0
  %844 = vmatprep.subr.mxu0 0.0
  %845 = vmatpush1.msra.mxu0 0.0
  %846 = vmatprep.subr.mxu0 0.0
  %847 = vmatpush1.msra.mxu0 0.0
  %848 = vmatprep.subr.mxu0 0.0
  %849 = vmatpush1.msra.mxu0 0.0
  %850 = vmatprep.subr.mxu0 0.0
  %851 = vmatpush1.msra.mxu0 0.0
  %852 = vmatprep.subr.mxu0 0.0
  %853 = vmatpush1.msra.mxu0 0.0
  %854 = vmatprep.subr.mxu0 0.0
  %855 = vmatpush1.msra.mxu0 0.0
  %856 = vmatprep.subr.mxu0 0.0
  %857 = vmatpush1.msra.mxu0 0.0
  %858 = vmatprep.subr.mxu0 0.0
  %859 = vmatpush1.msra.mxu0 0.0
  %860 = vmatprep.subr.mxu0 0.0
  %861 = vmatpush1.msra.mxu0 0.0
  %862 = vmatprep.subr.mxu0 0.0
  %863 = vmatpush1.msra.mxu0 0.0
  %864 = vmatprep.subr.mxu0 0.0
  %865 = vmatpush1.msra.mxu0 0.0
  %866 = vmatprep.subr.mxu0 0.0
  %867 = vmatpush1.msra.mxu0 0.0
  %868 = vmatprep.subr.mxu0 0.0
  %869 = vmatpush1.msra.mxu0 0.0
  %870 = vmatprep.mubr.f32.mxu0 0.0
  %871 = vmatmul.mubr.f32.gmra.mrb[0].mxu0 %v804
  %v872 = vpop.f32.mrb[0].mxu0
  %v873 = vadd.f32 0.0, %v872
  %v874 = vpop.f32.mrb[0].mxu0
  %v875 = vadd.f32 0.0, %v874
  %876 = vdwg.mxu0
  %s877 = scalar_lea.vmem %s0, 112
  %v878 = vld [vmem:[%s877] sm:$0xff]
  %v879 = vld [vmem:[%s877 + $0x8] sm:$0xff]
  %v880 = vadd.f32 %v878, %v873
  %v881 = vadd.f32 %v879, %v875
  %v882 = vxor.u32 %v880, 2147483648
  %v883 = vxor.u32 %v881, 2147483648
  %v884 = vmul.f32 %v882, 1.442695
  %v885 = vpow.pop %v884
  %v886 = vmul.f32 %v883, 1.442695
  %v887 = vpow.pop %v886
  %v888 = vadd.f32 %v885, 1.0
  %v889 = vadd.f32 %v887, 1.0
  %v890 = vrcp.pop %v888
  %v891 = vmul.f32 1.0, %v890
  %v892 = vrcp.pop %v889
  %v893 = vmul.f32 1.0, %v892
  %v894 = vtanh.pop %v881
  %v895 = vmul.f32 %v891, %v794
  %897 = vrot.lane.b32.xlu0 %v894, 64
  %v898 = vpop.permute.xlu0 %897
  %v900 = vmul.f32 %v891, %v898
  %902 = vrot.lane.b32.xlu0 %v900, 64
  %v903 = vpop.permute.xlu0 %902
  %v905 = vadd.f32 %v895, %v903
  %v906 = vtanh.pop %v905
  %908 = vrot.lane.b32.xlu0 %v906, 64
  %v909 = vpop.permute.xlu0 %908
  %v911 = vmul.f32 %v893, %v909
  %s912 = scalar_lea.vmem %s2, 56
  %913 = vst.msk [vmem:[%s912] sm:$0xff] %vm27, %v911
  // Predicated region
  $region10: #{single_rnn_forward.1} parent=0 // pred_check
    _
  $region11: #{single_rnn_forward.1} parent=0 // pred_check_branch
    %915 = sbr.rel (0) target = $region13
  $region12: #{single_rnn_forward.1} parent=0 // pred_region
    _
  $region13: #{single_rnn_forward.1} parent=0 // pred_fallthru
    _
  // Predicated region
  $region14: #{single_rnn_forward.1} parent=0 // pred_check
    _
  $region15: #{single_rnn_forward.1} parent=0 // pred_check_branch
    %917 = sbr.rel (0) target = $region17
  $region16: #{single_rnn_forward.1} parent=0 // pred_region
    _
  $region17: #{single_rnn_forward.1} parent=0 // pred_fallthru
    _

</llo_original>
